<compile_context>
chip_gen: v7x
topology: tpu7x:2x2x1
jax: 0.10.0
libtpu: 0.0.40
codegen_flags: <defaults>
</compile_context>

<pallas_src>
import math

import jax
import jax.numpy as jnp
from jax import lax
from jax.experimental import pallas as pl
from jax.experimental.pallas import tpu as pltpu


def _graph_conv_kernel(nodes_ref, edges_ref, w01_ref, m_ref, edge_b_ref,
                       bias_ref, out_ref):
    # Block shapes (per grid step b, TB graphs per step):
    #   nodes_ref : (TB*N, F_in)     -- batch flattened into rows wrapper-side
    #   edges_ref : (TB, N, N)
    #   w01_ref   : (F_in, 2*F_out)  -- fused [W0 - W1 | W1]
    #   m_ref     : (N, F_out)
    #   edge_b_ref: (N, N)
    #   bias_ref  : (1, F_out)
    #   out_ref   : (TB, N, F_out)
    tb, n, _ = edges_ref.shape
    f_out = m_ref.shape[1]

    # ---- fused node projection: one tall MXU matmul --------------------------------
    h = jnp.dot(nodes_ref[...], w01_ref[...],
                preferred_element_type=jnp.float32)            # (TB*N, 2*F_out)
    hd = h[:, :f_out].reshape(tb, n, f_out)                    # h0 - h1
    h1 = h[:, f_out:].reshape(tb, n, f_out)                    # h1

    m = m_ref[...]                                             # (N, F_out)
    v1 = m[None] * h1                                          # (TB, N, F_out)

    # ---- edge features ---------------------------------------------------------------
    a = edges_ref[...] + edge_b_ref[...][None]                 # (TB, N, N)

    # Diagonal of A (unchanged by symmetrization): (ef*I)@(M*h0) becomes d * (M*h0).
    row = lax.broadcasted_iota(jnp.int32, (n, n), 0)
    col = lax.broadcasted_iota(jnp.int32, (n, n), 1)
    diag_mask = row == col
    d = jnp.sum(jnp.where(diag_mask[None], a, 0.0),
                axis=-1, keepdims=True)                        # (TB, N, 1)

    # Symmetrize for the single (off-diagonal-carrying) matmul.
    ef = (jnp.swapaxes(a, 1, 2) + a) * 0.5                     # (TB, N, N)

    # out = ef @ (M*h1) + d * (M*(h0-h1)) + bias     (diag of ef@v1 folds with d-terms)
    off = jnp.einsum('bij,bjf->bif', ef, v1,
                     preferred_element_type=jnp.float32)       # (TB, N, F_out)
    out = off + d * (m[None] * hd) + bias_ref[...]
    out_ref[...] = out.astype(out_ref.dtype)


def _choose_batch_tile(B, N, F_in, F_out, vmem_budget_bytes=24 * 1024 * 1024):
    # Per-graph streamed f32 bytes, double-buffered by the pipeline.
    per_graph = 4 * 2 * (N * F_in + N * N + N * F_out)
    tb = max(1, min(B, vmem_budget_bytes // max(per_graph, 1)))
    # Keep >= 2 grid steps so both v7x TensorCores get work.
    if B >= 2:
        tb = min(tb, max(1, B // 2))
    # TB must evenly divide B (kernel has no remainder handling).
    while B % tb != 0:
        tb -= 1
    return tb


def graph_conv(input_nodes, input_edges, W, M, edge_b, bias):
    """Pallas _GraphConv forward.

    input_nodes: (B, N, F_in) f32
    input_edges: (B, N, N)    f32
    W:           (2, F_in, F_out)
    M:           (N, F_out)
    edge_b:      (N, N)
    bias:        (F_out,)
    returns:     (B, N, F_out)
    """
    B, N, F_in = input_nodes.shape
    F_out = W.shape[2]

    tb = _choose_batch_tile(B, N, F_in, F_out)
    grid = (B // tb,)

    # Fused projection weights: [W0 - W1 | W1] -> one MXU RHS push, and h0-h1
    # (needed only for the diagonal scale) comes out directly.
    w01 = jnp.concatenate([W[0] - W[1], W[1]], axis=1)         # (F_in, 2*F_out)
    bias2d = bias.reshape(1, F_out)
    nodes_flat = input_nodes.reshape(B * N, F_in)              # tall MXU LHS

    flops = 2 * B * (N * F_in * 2 * F_out + N * N * F_out)
    bytes_accessed = 4 * (B * N * F_in + B * N * N + B * N * F_out
                          + F_in * 2 * F_out + N * F_out + N * N + F_out)

    # Conservative VMEM estimate (streamed blocks double-buffered + invariants +
    # intermediates), clamped to a value safe on every chip (v7x: 64 MiB/TC).
    vmem_est = 4 * (2 * (tb * N * F_in + tb * N * N + tb * N * F_out)
                    + 2 * (F_in * 2 * F_out + N * F_out + N * N + F_out)
                    + 6 * tb * N * max(N, F_out))
    vmem_limit = int(min(64 * 1024 * 1024,
                         max(32 * 1024 * 1024, 2 * vmem_est)))

    return pl.pallas_call(
        _graph_conv_kernel,
        out_shape=jax.ShapeDtypeStruct((B, N, F_out), jnp.float32),
        grid_spec=pltpu.PrefetchScalarGridSpec(
            num_scalar_prefetch=0,
            grid=grid,
            in_specs=[
                pl.BlockSpec((tb * N, F_in),    lambda b: (b, 0)),     # nodes (flat)
                pl.BlockSpec((tb, N, N),        lambda b: (b, 0, 0)),  # edges
                pl.BlockSpec((F_in, 2 * F_out), lambda b: (0, 0)),     # fused W
                pl.BlockSpec((N, F_out),        lambda b: (0, 0)),     # M
                pl.BlockSpec((N, N),            lambda b: (0, 0)),     # edge_b
                pl.BlockSpec((1, F_out),        lambda b: (0, 0)),     # bias
            ],
            out_specs=pl.BlockSpec((tb, N, F_out), lambda b: (b, 0, 0)),
        ),
        compiler_params=pltpu.CompilerParams(
            dimension_semantics=("parallel",),
            vmem_limit_bytes=vmem_limit),
        cost_estimate=pl.CostEstimate(flops=flops, transcendentals=0,
                                      bytes_accessed=bytes_accessed),
    )(nodes_flat, input_edges, w01, M, edge_b, bias2d)


def _reference(input_nodes, input_edges, W, M, edge_b, bias):
    h0 = jnp.matmul(input_nodes, W[0])
    h1 = jnp.matmul(input_nodes, W[1])
    ef = input_edges + edge_b
    ef = (jnp.transpose(ef, (0, 2, 1)) + ef) / 2.0
    N = edge_b.shape[0]
    E = jnp.eye(N, dtype=jnp.float32)
    out = jnp.matmul(ef * E, M * h0) + jnp.matmul(ef * (1.0 - E), M * h1)
    return out + bias.reshape(1, 1, -1)


def _xavier_uniform(key, shape, gain):
    fan_in, fan_out = shape[-2], shape[-1]
    bound = gain * math.sqrt(6.0 / (fan_in + fan_out))
    return jax.random.uniform(key, shape, jnp.float32, -bound, bound)


if __name__ == "__main__":
    # Small shapes consistent with the module.
    B, N, F_in, F_out = 2, 16, 8, 32     # N == adj_feat_dim

    root = jax.random.PRNGKey(0)
    k_nodes, k_edges, k_w, k_m, k_bias = jax.random.split(root, 5)

    input_nodes = jax.random.normal(k_nodes, (B, N, F_in), jnp.float32)
    input_edges = jax.random.normal(k_edges, (B, N, N), jnp.float32)

    # Deterministic parameter init (shapes per __init__).
    W = _xavier_uniform(k_w, (2, F_in, F_out), gain=1.414)
    M = _xavier_uniform(k_m, (N, F_out), gain=1.414)
    edge_b = jnp.full((N, N), 1e-6, jnp.float32)
    stdv = 1.0 / math.sqrt(F_out)
    bias = jax.random.uniform(k_bias, (F_out,), jnp.float32, -stdv, stdv)

    out = graph_conv(input_nodes, input_edges, W, M, edge_b, bias)
    out = jax.block_until_ready(out)

    ref = _reference(input_nodes, input_edges, W, M, edge_b, bias)
    assert out.shape == (B, N, F_out)
    assert jnp.allclose(out, ref, atol=2e-5, rtol=2e-5)

    print("KERNEL_OK")
</pallas_src>

<mosaic_0001>
module attributes {stable_mosaic.version = 11 : i64} {
  func.func @_graph_conv_kernel(%arg0: i32, %arg1: memref<16x8xf32, #tpu.memory_space<vmem>>, %arg2: memref<1x16x16xf32, #tpu.memory_space<vmem>>, %arg3: memref<8x64xf32, #tpu.memory_space<vmem>>, %arg4: memref<16x32xf32, #tpu.memory_space<vmem>>, %arg5: memref<16x16xf32, #tpu.memory_space<vmem>>, %arg6: memref<1x32xf32, #tpu.memory_space<vmem>>, %arg7: memref<1x16x32xf32, #tpu.memory_space<vmem>>) attributes {dimension_semantics = [#tpu.dimension_semantics<parallel>], iteration_bounds = array<i64: 2>, scalar_prefetch = 0 : i64, scratch_operands = 0 : i64, tpu.core_type = #tpu.core_type<tc>, window_params = [{transform_indices = @transform_0, window_bounds = array<i64: 16, 8>}, {transform_indices = @transform_1, window_bounds = array<i64: 1, 16, 16>}, {pipeline_mode = #tpu.pipeline_mode<synchronous>, transform_indices = @transform_2, window_bounds = array<i64: 8, 64>}, {pipeline_mode = #tpu.pipeline_mode<synchronous>, transform_indices = @transform_3, window_bounds = array<i64: 16, 32>}, {pipeline_mode = #tpu.pipeline_mode<synchronous>, transform_indices = @transform_4, window_bounds = array<i64: 16, 16>}, {pipeline_mode = #tpu.pipeline_mode<synchronous>, transform_indices = @transform_5, window_bounds = array<i64: 1, 32>}, {transform_indices = @transform_6, window_bounds = array<i64: 1, 16, 32>}]} {
    %c0 = arith.constant 0 : index
    %c0_0 = arith.constant 0 : index
    %0 = vector.load %arg1[%c0, %c0_0] : memref<16x8xf32, #tpu.memory_space<vmem>>, vector<16x8xf32>
    %c0_1 = arith.constant 0 : index
    %c0_2 = arith.constant 0 : index
    %1 = vector.load %arg3[%c0_1, %c0_2] : memref<8x64xf32, #tpu.memory_space<vmem>>, vector<8x64xf32>
    %cst = arith.constant dense<0.000000e+00> : vector<16x64xf32>
    %2 = tpu.matmul %0, %1, %cst {dimension_numbers = #tpu.dot_dimension_numbers<[1], [0], [0], [1], [0, 0, 1, 1], [], []>} : vector<16x8xf32>, vector<8x64xf32>, vector<16x64xf32> -> vector<16x64xf32>
    %3 = vector.extract_strided_slice %2 {offsets = [0, 0], sizes = [16, 32], strides = [1, 1]} : vector<16x64xf32> to vector<16x32xf32>
    %4 = vector.shape_cast %3 : vector<16x32xf32> to vector<1x16x32xf32>
    %5 = vector.extract_strided_slice %2 {offsets = [0, 32], sizes = [16, 32], strides = [1, 1]} : vector<16x64xf32> to vector<16x32xf32>
    %6 = vector.shape_cast %5 : vector<16x32xf32> to vector<1x16x32xf32>
    %c0_3 = arith.constant 0 : index
    %c0_4 = arith.constant 0 : index
    %7 = vector.load %arg4[%c0_3, %c0_4] : memref<16x32xf32, #tpu.memory_space<vmem>>, vector<16x32xf32>
    %8 = vector.shape_cast %7 : vector<16x32xf32> to vector<1x16x32xf32>
    %9 = arith.mulf %8, %6 : vector<1x16x32xf32>
    %c0_5 = arith.constant 0 : index
    %c0_6 = arith.constant 0 : index
    %c0_7 = arith.constant 0 : index
    %10 = vector.load %arg2[%c0_5, %c0_6, %c0_7] : memref<1x16x16xf32, #tpu.memory_space<vmem>>, vector<1x16x16xf32>
    %c0_8 = arith.constant 0 : index
    %c0_9 = arith.constant 0 : index
    %11 = vector.load %arg5[%c0_8, %c0_9] : memref<16x16xf32, #tpu.memory_space<vmem>>, vector<16x16xf32>
    %12 = vector.shape_cast %11 : vector<16x16xf32> to vector<1x16x16xf32>
    %13 = arith.addf %10, %12 : vector<1x16x16xf32>
    %14 = tpu.iota {dimensions = array<i32: 0>} : vector<16x16xi32>
    %15 = tpu.iota {dimensions = array<i32: 1>} : vector<16x16xi32>
    %16 = arith.cmpi eq, %14, %15 : vector<16x16xi32>
    %17 = vector.shape_cast %16 : vector<16x16xi1> to vector<1x16x16xi1>
    %cst_10 = arith.constant 0.000000e+00 : f32
    %18 = vector.broadcast %cst_10 : f32 to vector<1x16x16xf32>
    %19 = arith.select %17, %13, %18 : vector<1x16x16xi1>, vector<1x16x16xf32>
    %cst_11 = arith.constant dense<0.000000e+00> : vector<1x16xf32>
    %20 = vector.multi_reduction <add>, %19, %cst_11 [2] : vector<1x16x16xf32> to vector<1x16xf32>
    %21 = vector.shape_cast %20 : vector<1x16xf32> to vector<1x16x1xf32>
    %22 = tpu.transpose %13, [0, 2, 1] : vector<1x16x16xf32> -> vector<1x16x16xf32>
    %23 = arith.addf %22, %13 : vector<1x16x16xf32>
    %cst_12 = arith.constant 5.000000e-01 : f32
    %24 = vector.broadcast %cst_12 : f32 to vector<1x16x16xf32>
    %25 = arith.mulf %23, %24 : vector<1x16x16xf32>
    "tpu.trace_start"() <{level = 10 : i32, message = "bij,bjf->bif"}> : () -> ()
    %cst_13 = arith.constant dense<0.000000e+00> : vector<1x16x32xf32>
    %26 = tpu.matmul %25, %9, %cst_13 {dimension_numbers = #tpu.dot_dimension_numbers<[2], [1], [1], [2], [0, 0, 0, 1, 1, 2], [0], [0]>} : vector<1x16x16xf32>, vector<1x16x32xf32>, vector<1x16x32xf32> -> vector<1x16x32xf32>
    "tpu.trace_stop"() : () -> ()
    %27 = vector.shape_cast %7 : vector<16x32xf32> to vector<1x16x32xf32>
    %28 = arith.mulf %27, %4 : vector<1x16x32xf32>
    %29 = vector.broadcast %21 : vector<1x16x1xf32> to vector<1x16x32xf32>
    %30 = arith.mulf %29, %28 : vector<1x16x32xf32>
    %31 = arith.addf %26, %30 : vector<1x16x32xf32>
    %c0_14 = arith.constant 0 : index
    %c0_15 = arith.constant 0 : index
    %32 = vector.load %arg6[%c0_14, %c0_15] : memref<1x32xf32, #tpu.memory_space<vmem>>, vector<1x32xf32>
    %33 = vector.shape_cast %32 : vector<1x32xf32> to vector<1x1x32xf32>
    %34 = vector.broadcast %33 : vector<1x1x32xf32> to vector<1x16x32xf32>
    %35 = arith.addf %31, %34 : vector<1x16x32xf32>
    %c0_16 = arith.constant 0 : index
    %c0_17 = arith.constant 0 : index
    %c0_18 = arith.constant 0 : index
    %36 = vector.load %arg7[%c0_16, %c0_17, %c0_18] : memref<1x16x32xf32, #tpu.memory_space<vmem>>, vector<1x16x32xf32>
    tpu.vector_store %arg7[%c0_16, %c0_17, %c0_18], %35 {strides = array<i32>} : memref<1x16x32xf32, #tpu.memory_space<vmem>>, vector<1x16x32xf32>,
    return
  }
  func.func @transform_0(%arg0: i32) -> (i32, i32) {
    %c0_i32 = arith.constant 0 : i32
    %c0_i32_0 = arith.constant 0 : i32
    return %arg0, %c0_i32 : i32, i32
  }
  func.func @transform_1(%arg0: i32) -> (i32, i32, i32) {
    %c0_i32 = arith.constant 0 : i32
    %c0_i32_0 = arith.constant 0 : i32
    %c0_i32_1 = arith.constant 0 : i32
    return %arg0, %c0_i32, %c0_i32_0 : i32, i32, i32
  }
  func.func @transform_2(%arg0: i32) -> (i32, i32) {
    %c0_i32 = arith.constant 0 : i32
    %c0_i32_0 = arith.constant 0 : i32
    %c0_i32_1 = arith.constant 0 : i32
    return %c0_i32, %c0_i32_0 : i32, i32
  }
  func.func @transform_3(%arg0: i32) -> (i32, i32) {
    %c0_i32 = arith.constant 0 : i32
    %c0_i32_0 = arith.constant 0 : i32
    %c0_i32_1 = arith.constant 0 : i32
    return %c0_i32, %c0_i32_0 : i32, i32
  }
  func.func @transform_4(%arg0: i32) -> (i32, i32) {
    %c0_i32 = arith.constant 0 : i32
    %c0_i32_0 = arith.constant 0 : i32
    %c0_i32_1 = arith.constant 0 : i32
    return %c0_i32, %c0_i32_0 : i32, i32
  }
  func.func @transform_5(%arg0: i32) -> (i32, i32) {
    %c0_i32 = arith.constant 0 : i32
    %c0_i32_0 = arith.constant 0 : i32
    %c0_i32_1 = arith.constant 0 : i32
    return %c0_i32, %c0_i32_0 : i32, i32
  }
  func.func @transform_6(%arg0: i32) -> (i32, i32, i32) {
    %c0_i32 = arith.constant 0 : i32
    %c0_i32_0 = arith.constant 0 : i32
    %c0_i32_1 = arith.constant 0 : i32
    return %arg0, %c0_i32, %c0_i32_0 : i32, i32, i32
  }
}

</mosaic_0001>

<llo_original>
// kernel: tpu_custom_call.1
$region0: #{tpu_custom_call.1}
  #allocation0 [shape = 'u32[]', space=smem, size = 0x4, offset = 0x4, fixed_abs, tag = 'smem constant byte address 0x4 - core index']
  #allocation1 [shape = 'u32[144,128]{1,0:T(1,128)}', space=vmem, size = 0x12000, scoped, tag = 'internal scratch']
  %s0 = inlined_call_operand.vmem [shape: f32[32,8], index: 0, kind: input, shape index: {}]
  %s1 = inlined_call_operand.vmem [shape: f32[2,16,16], index: 1, kind: input, shape index: {}]
  %s2 = inlined_call_operand.hbm [shape: f32[8,64], index: 2, kind: input, shape index: {}]
  %s3 = inlined_call_operand.vmem [shape: f32[16,32], index: 3, kind: input, shape index: {}]
  %s4 = inlined_call_operand.hbm [shape: f32[16,16], index: 4, kind: input, shape index: {}]
  %s5 = inlined_call_operand.vmem [shape: f32[1,32], index: 5, kind: input, shape index: {}]
  %s6 = inlined_call_operand.hbm [shape: f32[2,16,32], index: 6, kind: output, shape index: {}]
  %s7 = sld [smem:[#allocation0]]
  $region65: #{tpu_custom_call.1} parent=0
    _
  %s9 = ssub.s32 1, %s7
  %s10 = scalar_select 0, %s9, %s7
  $region1: #{tpu_custom_call.1} parent=0
    #allocation2 [shape = 'u8[4096]{0}', space=vmem, size = 0x1000, scoped, tag = 'input window, operand 2, single buffered']
    #allocation3 [shape = 's32[2]{0}', space=sflag, size = 0x8, scoped, tag = 'scoped memory for tpu_custom_call.1']
    #allocation4 [shape = 's32[2]{0}', space=sflag, size = 0x8, scoped, tag = 'scoped memory for tpu_custom_call.1']
    #allocation5 [shape = 'u8[8192]{0}', space=vmem, size = 0x2000, scoped, tag = 'input window, operand 4, single buffered']
    #allocation6 [shape = 's32[1]{0}', space=sflag, size = 0x4, scoped, tag = 'scoped memory for tpu_custom_call.1']
    #allocation7 [shape = 'u8[16384]{0}', space=vmem, size = 0x4000, scoped, tag = 'output window, operand 0']
    %11 = vsyncpa [#allocation3], 0
    %12 = vsyncpa [#allocation6], 0
    %13 = vsyncpa [#allocation4], 0
    %s14 = scalar_lea.sflag [#allocation4], 1
    %15 = vsyncpa %s14, 0
    loop: start=0, step=1, limit=4
    $region2: #{tpu_custom_call.1} parent=1 // loop_pre_header
      _
    $region3: #{tpu_custom_call.1} parent=1 // loop_header
      %s17 = sphi 0, %s21
      %p18 = scmp.ge.s32.totalorder %s17, 4
      %s27 = sphi 0, %s29
      %s30 = sphi 0, %s27
      %s31 = sphi 0, %s30
      %s47 = sphi 0, %s31
      %s53 = sphi 0, %s55
      %s56 = sphi 0, %s53
      %s57 = sphi 0, %s56
      %s73 = sphi 0, %s57
      %s77 = sphi 0, %s77
      %s79 = sphi 0, %s77
      %s80 = sphi 0, %s79
      %s94 = sphi 0, %s80
      %s98 = sphi 0, %s98
      %s100 = sphi 0, %s98
      %s101 = sphi 0, %s100
      %s115 = sphi 0, %s101
      %s119 = sphi 0, %s119
      %s121 = sphi 0, %s119
      %s122 = sphi 0, %s121
      %s136 = sphi 0, %s122
      %s140 = sphi 0, %s140
      %s142 = sphi 0, %s140
      %s143 = sphi 0, %s142
      %s157 = sphi 0, %s143
      %s163 = sphi 0, %s165
      %s166 = sphi 0, %s163
      %s167 = sphi 0, %s166
      %s183 = sphi 0, %s167
    $region4: #{tpu_custom_call.1} parent=1 // loop_header_branch
      %20 = sbr.rel (%p18) target = $region8
    $region5: #{tpu_custom_call.1} parent=1 // loop_body
      %s22 = ssub.s32 %s17, 1
      %s23 = ssub.s32 %s17, 2
      %s24 = sadd.s32 %s17, 1
      %s25 = ssub.s32 %s17, %s24
      %p26 = scmp.eq.s32.totalorder %s25, 0
      %s28 = sadd.s32 %s27, 1
      %s29 = scalar_select %p26, %s27, %s28
      %p32 = pneg %p26
      %p33 = scmp.eq.s32.totalorder %s17, 1
      %p34 = por %p32, %p33
      %p35 = scmp.ne.s32.totalorder %s27, %s30
      %p36 = scmp.eq.s32.totalorder %s17, 0
      %p37 = por %p35, %p36
      %p38 = scmp.ne.s32.totalorder %s27, %s30
      %p39 = scmp.eq.s32.totalorder %s22, 1
      %p40 = por %p38, %p39
      %p41 = scmp.ne.s32.totalorder %s30, %s31
      %p42 = scmp.eq.s32.totalorder %s22, 0
      %p43 = por %p41, %p42
      %p44 = scmp.ne.s32.totalorder %s30, %s31
      %p45 = scmp.eq.s32.totalorder %s23, 1
      %p46 = por %p44, %p45
      %p48 = scmp.ne.s32.totalorder %s31, %s47
      %p49 = scmp.eq.s32.totalorder %s23, 0
      %p50 = por %p48, %p49
      %s51 = ssub.s32 %s17, %s24
      %p52 = scmp.eq.s32.totalorder %s51, 0
      %s54 = sadd.s32 %s53, 1
      %s55 = scalar_select %p52, %s53, %s54
      %p58 = pneg %p52
      %p59 = scmp.eq.s32.totalorder %s17, 1
      %p60 = por %p58, %p59
      %p61 = scmp.ne.s32.totalorder %s53, %s56
      %p62 = scmp.eq.s32.totalorder %s17, 0
      %p63 = por %p61, %p62
      %p64 = scmp.ne.s32.totalorder %s53, %s56
      %p65 = scmp.eq.s32.totalorder %s22, 1
      %p66 = por %p64, %p65
      %p67 = scmp.ne.s32.totalorder %s56, %s57
      %p68 = scmp.eq.s32.totalorder %s22, 0
      %p69 = por %p67, %p68
      %p70 = scmp.ne.s32.totalorder %s56, %s57
      %p71 = scmp.eq.s32.totalorder %s23, 1
      %p72 = por %p70, %p71
      %p74 = scmp.ne.s32.totalorder %s57, %s73
      %p75 = scmp.eq.s32.totalorder %s23, 0
      %p76 = por %p74, %p75
      %s78 = sadd.s32 %s77, 1
      %p81 = scmp.eq.s32.totalorder %s17, 1
      %p82 = scmp.ne.s32.totalorder %s77, %s79
      %p83 = scmp.eq.s32.totalorder %s17, 0
      %p84 = por %p82, %p83
      %p85 = scmp.ne.s32.totalorder %s77, %s79
      %p86 = scmp.eq.s32.totalorder %s22, 1
      %p87 = por %p85, %p86
      %p88 = scmp.ne.s32.totalorder %s79, %s80
      %p89 = scmp.eq.s32.totalorder %s22, 0
      %p90 = por %p88, %p89
      %p91 = scmp.ne.s32.totalorder %s79, %s80
      %p92 = scmp.eq.s32.totalorder %s23, 1
      %p93 = por %p91, %p92
      %p95 = scmp.ne.s32.totalorder %s80, %s94
      %p96 = scmp.eq.s32.totalorder %s23, 0
      %p97 = por %p95, %p96
      %s99 = sadd.s32 %s98, 1
      %p102 = scmp.eq.s32.totalorder %s17, 1
      %p103 = scmp.ne.s32.totalorder %s98, %s100
      %p104 = scmp.eq.s32.totalorder %s17, 0
      %p105 = por %p103, %p104
      %p106 = scmp.ne.s32.totalorder %s98, %s100
      %p107 = scmp.eq.s32.totalorder %s22, 1
      %p108 = por %p106, %p107
      %p109 = scmp.ne.s32.totalorder %s100, %s101
      %p110 = scmp.eq.s32.totalorder %s22, 0
      %p111 = por %p109, %p110
      %p112 = scmp.ne.s32.totalorder %s100, %s101
      %p113 = scmp.eq.s32.totalorder %s23, 1
      %p114 = por %p112, %p113
      %p116 = scmp.ne.s32.totalorder %s101, %s115
      %p117 = scmp.eq.s32.totalorder %s23, 0
      %p118 = por %p116, %p117
      %s120 = sadd.s32 %s119, 1
      %p123 = scmp.eq.s32.totalorder %s17, 1
      %p124 = scmp.ne.s32.totalorder %s119, %s121
      %p125 = scmp.eq.s32.totalorder %s17, 0
      %p126 = por %p124, %p125
      %p127 = scmp.ne.s32.totalorder %s119, %s121
      %p128 = scmp.eq.s32.totalorder %s22, 1
      %p129 = por %p127, %p128
      %p130 = scmp.ne.s32.totalorder %s121, %s122
      %p131 = scmp.eq.s32.totalorder %s22, 0
      %p132 = por %p130, %p131
      %p133 = scmp.ne.s32.totalorder %s121, %s122
      %p134 = scmp.eq.s32.totalorder %s23, 1
      %p135 = por %p133, %p134
      %p137 = scmp.ne.s32.totalorder %s122, %s136
      %p138 = scmp.eq.s32.totalorder %s23, 0
      %p139 = por %p137, %p138
      %s141 = sadd.s32 %s140, 1
      %p144 = scmp.eq.s32.totalorder %s17, 1
      %p145 = scmp.ne.s32.totalorder %s140, %s142
      %p146 = scmp.eq.s32.totalorder %s17, 0
      %p147 = por %p145, %p146
      %p148 = scmp.ne.s32.totalorder %s140, %s142
      %p149 = scmp.eq.s32.totalorder %s22, 1
      %p150 = por %p148, %p149
      %p151 = scmp.ne.s32.totalorder %s142, %s143
      %p152 = scmp.eq.s32.totalorder %s22, 0
      %p153 = por %p151, %p152
      %p154 = scmp.ne.s32.totalorder %s142, %s143
      %p155 = scmp.eq.s32.totalorder %s23, 1
      %p156 = por %p154, %p155
      %p158 = scmp.ne.s32.totalorder %s143, %s157
      %p159 = scmp.eq.s32.totalorder %s23, 0
      %p160 = por %p158, %p159
      %s161 = ssub.s32 %s17, %s24
      %p162 = scmp.eq.s32.totalorder %s161, 0
      %s164 = sadd.s32 %s163, 1
      %s165 = scalar_select %p162, %s163, %s164
      %p168 = pneg %p162
      %p169 = scmp.eq.s32.totalorder %s17, 1
      %p170 = por %p168, %p169
      %p171 = scmp.ne.s32.totalorder %s163, %s166
      %p172 = scmp.eq.s32.totalorder %s17, 0
      %p173 = por %p171, %p172
      %p174 = scmp.ne.s32.totalorder %s163, %s166
      %p175 = scmp.eq.s32.totalorder %s22, 1
      %p176 = por %p174, %p175
      %p177 = scmp.ne.s32.totalorder %s166, %s167
      %p178 = scmp.eq.s32.totalorder %s22, 0
      %p179 = por %p177, %p178
      %p180 = scmp.ne.s32.totalorder %s166, %s167
      %p181 = scmp.eq.s32.totalorder %s23, 1
      %p182 = por %p180, %p181
      %p184 = scmp.ne.s32.totalorder %s167, %s183
      %p185 = scmp.eq.s32.totalorder %s23, 0
      %p186 = por %p184, %p185
      %p187 = scmp.le.s32.totalorder 1, %s17
      %p188 = scmp.lt.s32.totalorder %s17, 3
      %p189 = pnand %p187, %p188
      %p190 = pneg %p189
      // Predicated region
      $region9: #{tpu_custom_call.1} parent=5 // pred_check
        _
      $region10: #{tpu_custom_call.1} parent=5 // pred_check_branch
        %192 = sbr.rel (%p189) target = $region12
      $region11: #{tpu_custom_call.1} parent=5 // pred_region
        %s193 = ssub.s32 %s17, 1
        // Predicated region
        $region13: #{tpu_custom_call.1} parent=11 // pred_check
          %p194 = pneg %p90
        $region14: #{tpu_custom_call.1} parent=11 // pred_check_branch
          %196 = sbr.rel (%p194) target = $region16
        $region15: #{tpu_custom_call.1} parent=11 // pred_region
          %s198 = ssub.s32 128, 128
          %199 = vsyncadd [#allocation3], %s198
          %s201 = sshll.u32 [#allocation2], 4
          %s202 = int_to_ptr.vmem [resolvable:$true] %s201
          %204 = dma.hbm_to_vmem [thread:$0]  %s2, 128, %s202, [#allocation3]
        $region16: #{tpu_custom_call.1} parent=11 // pred_fallthru
          _
        // Predicated region
        $region17: #{tpu_custom_call.1} parent=11 // pred_check
          %p205 = pneg %p111
        $region18: #{tpu_custom_call.1} parent=11 // pred_check_branch
          %207 = sbr.rel (%p205) target = $region20
        $region19: #{tpu_custom_call.1} parent=11 // pred_region
          _
        $region20: #{tpu_custom_call.1} parent=11 // pred_fallthru
          _
        // Predicated region
        $region21: #{tpu_custom_call.1} parent=11 // pred_check
          %p208 = pneg %p132
        $region22: #{tpu_custom_call.1} parent=11 // pred_check_branch
          %210 = sbr.rel (%p208) target = $region24
        $region23: #{tpu_custom_call.1} parent=11 // pred_region
          %s212 = ssub.s32 256, 256
          %213 = vsyncadd [#allocation6], %s212
          %s214 = sshll.u32 [#allocation5], 4
          %s215 = int_to_ptr.vmem [resolvable:$true] %s214
          %220 = dma.hbm_to_vmem [thread:$0]  %s4, 256, %s215, [#allocation6], 128, 128, 8
        $region24: #{tpu_custom_call.1} parent=11 // pred_fallthru
          _
        // Predicated region
        $region25: #{tpu_custom_call.1} parent=11 // pred_check
          %p221 = pneg %p153
        $region26: #{tpu_custom_call.1} parent=11 // pred_check_branch
          %223 = sbr.rel (%p221) target = $region28
        $region27: #{tpu_custom_call.1} parent=11 // pred_region
          _
        $region28: #{tpu_custom_call.1} parent=11 // pred_fallthru
          _
      $region12: #{tpu_custom_call.1} parent=5 // pred_fallthru
        _
      %p224 = scmp.lt.s32.totalorder %s17, 2
      // Predicated region
      $region29: #{tpu_custom_call.1} parent=5 // pred_check
        %p225 = pneg %p224
      $region30: #{tpu_custom_call.1} parent=5 // pred_check_branch
        %227 = sbr.rel (%p225) target = $region32
      $region31: #{tpu_custom_call.1} parent=5 // pred_region
        // Predicated region
        $region33: #{tpu_custom_call.1} parent=31 // pred_check
          %p228 = pneg %p37
        $region34: #{tpu_custom_call.1} parent=31 // pred_check_branch
          %230 = sbr.rel (%p228) target = $region36
        $region35: #{tpu_custom_call.1} parent=31 // pred_region
          %s231 = smul.u32 2, %s17
          %p232 = scmp.lt.s32.totalorder %s231, 3
          %s233 = scalar_select %p232, %s231, 3
          %s234 = smul.addr %s233, 8
          %s235 = scalar_lea.vmem %s0, %s234
          %s236 = smul.u32 2, %s17
        $region36: #{tpu_custom_call.1} parent=31 // pred_fallthru
          _
        // Predicated region
        $region37: #{tpu_custom_call.1} parent=31 // pred_check
          %p237 = pneg %p63
        $region38: #{tpu_custom_call.1} parent=31 // pred_check_branch
          %239 = sbr.rel (%p237) target = $region40
        $region39: #{tpu_custom_call.1} parent=31 // pred_region
          %p240 = scmp.lt.s32.totalorder %s17, 1
          %s241 = scalar_select %p240, %s17, 1
          %s242 = smul.addr %s241, 2
          %s243 = smul.addr %s242, 8
          %s244 = scalar_lea.vmem %s1, %s243
        $region40: #{tpu_custom_call.1} parent=31 // pred_fallthru
          _
      $region32: #{tpu_custom_call.1} parent=5 // pred_fallthru
        _
      %p245 = scmp.le.s32.totalorder 1, %s17
      %p246 = scmp.lt.s32.totalorder %s17, 3
      %p247 = pnand %p245, %p246
      %p248 = pneg %p247
      // Predicated region
      $region41: #{tpu_custom_call.1} parent=5 // pred_check
        _
      $region42: #{tpu_custom_call.1} parent=5 // pred_check_branch
        %250 = sbr.rel (%p247) target = $region44
      $region43: #{tpu_custom_call.1} parent=5 // pred_region
        %s251 = ssub.s32 %s17, 1
        // Predicated region
        $region45: #{tpu_custom_call.1} parent=43 // pred_check
          %p252 = pneg %p90
        $region46: #{tpu_custom_call.1} parent=43 // pred_check_branch
          %254 = sbr.rel (%p252) target = $region48
        $region47: #{tpu_custom_call.1} parent=43 // pred_region
          %255 = dma.done [#allocation3], 128
        $region48: #{tpu_custom_call.1} parent=43 // pred_fallthru
          _
        // Predicated region
        $region49: #{tpu_custom_call.1} parent=43 // pred_check
          %p256 = pneg %p132
        $region50: #{tpu_custom_call.1} parent=43 // pred_check_branch
          %258 = sbr.rel (%p256) target = $region52
        $region51: #{tpu_custom_call.1} parent=43 // pred_region
          %259 = dma.done [#allocation6], 256
        $region52: #{tpu_custom_call.1} parent=43 // pred_fallthru
          _
        %s260 = smul.u32 2, %s22
        %p261 = scmp.lt.s32.totalorder %s260, 3
        %s262 = scalar_select %p261, %s260, 3
        %s263 = smul.addr %s262, 8
        %s264 = scalar_lea.vmem %s0, %s263
        %p265 = pneg %p43
        %p266 = pneg %p40
        %p267 = scmp.lt.s32.totalorder %s22, 1
        %s268 = scalar_select %p267, %s22, 1
        %s269 = smul.addr %s268, 2
        %s270 = smul.addr %s269, 8
        %s271 = scalar_lea.vmem %s1, %s270
        %p272 = pneg %p69
        %p273 = pneg %p66
        %p274 = pneg %p90
        %p275 = pneg %p87
        %p276 = pneg %p111
        %p277 = pneg %p108
        %p278 = pneg %p132
        %p279 = pneg %p129
        %p280 = pneg %p153
        %p281 = pneg %p150
        %p282 = pneg %p179
        %p283 = pneg %p176
        %s284 = sand.u32 %s166, 1
        %s285 = scalar_lea.sflag [#allocation4], %s284
        %s286 = sand.u32 %s166, 1
        %s287 = smul.addr %s286, 16
        %s288 = scalar_lea.vmem [#allocation7], %s287
        %s289 = smul.u32 2, %s22
        %p290 = scmp.lt.s32.totalorder %s289, 3
        %s291 = scalar_select %p290, %s289, 3
        %s292 = smul.addr %s291, 8
        %s293 = scalar_lea.vmem %s0, %s292
        %s294 = smul.u32 2, %s22
        %p295 = scmp.lt.s32.totalorder %s22, 1
        %s296 = scalar_select %p295, %s22, 1
        %s297 = smul.addr %s296, 2
        %s298 = smul.addr %s297, 8
        %s299 = scalar_lea.vmem %s1, %s298
        %v300 = vld [vmem:[%s293] sm:$0xff]
        %v301 = vld [vmem:[%s293 + $0x8] sm:$0xff]
        %v302 = vld [vmem:[#allocation2] sm:$0xff]
        %vm303 = vcmask 64512
        %v305 = vsel %vm303, %v300, 0
        %v308 = vsel %vm303, %v301, 0
        %310 = vmatprep.subr.mxu0 0.0
        %311 = vmatpush1.msra.mxu0 %v302
        %312 = vmatprep.subr.mxu0 0.0
        %313 = vmatpush1.msra.mxu0 0.0
        %314 = vmatprep.subr.mxu0 0.0
        %315 = vmatpush1.msra.mxu0 0.0
        %316 = vmatprep.subr.mxu0 0.0
        %317 = vmatpush1.msra.mxu0 0.0
        %318 = vmatprep.subr.mxu0 0.0
        %319 = vmatpush1.msra.mxu0 0.0
        %320 = vmatprep.subr.mxu0 0.0
        %321 = vmatpush1.msra.mxu0 0.0
        %322 = vmatprep.subr.mxu0 0.0
        %323 = vmatpush1.msra.mxu0 0.0
        %324 = vmatprep.subr.mxu0 0.0
        %325 = vmatpush1.msra.mxu0 0.0
        %326 = vmatprep.subr.mxu0 0.0
        %327 = vmatpush1.msra.mxu0 0.0
        %328 = vmatprep.subr.mxu0 0.0
        %329 = vmatpush1.msra.mxu0 0.0
        %330 = vmatprep.subr.mxu0 0.0
        %331 = vmatpush1.msra.mxu0 0.0
        %332 = vmatprep.subr.mxu0 0.0
        %333 = vmatpush1.msra.mxu0 0.0
        %334 = vmatprep.subr.mxu0 0.0
        %335 = vmatpush1.msra.mxu0 0.0
        %336 = vmatprep.subr.mxu0 0.0
        %337 = vmatpush1.msra.mxu0 0.0
        %338 = vmatprep.subr.mxu0 0.0
        %339 = vmatpush1.msra.mxu0 0.0
        %340 = vmatprep.subr.mxu0 0.0
        %341 = vmatpush1.msra.mxu0 0.0
        %342 = vmatprep.subr.mxu0 0.0
        %343 = vmatpush1.msra.mxu0 0.0
        %344 = vmatprep.subr.mxu0 0.0
        %345 = vmatpush1.msra.mxu0 0.0
        %346 = vmatprep.subr.mxu0 0.0
        %347 = vmatpush1.msra.mxu0 0.0
        %348 = vmatprep.subr.mxu0 0.0
        %349 = vmatpush1.msra.mxu0 0.0
        %350 = vmatprep.subr.mxu0 0.0
        %351 = vmatpush1.msra.mxu0 0.0
        %352 = vmatprep.subr.mxu0 0.0
        %353 = vmatpush1.msra.mxu0 0.0
        %354 = vmatprep.subr.mxu0 0.0
        %355 = vmatpush1.msra.mxu0 0.0
        %356 = vmatprep.subr.mxu0 0.0
        %357 = vmatpush1.msra.mxu0 0.0
        %358 = vmatprep.subr.mxu0 0.0
        %359 = vmatpush1.msra.mxu0 0.0
        %360 = vmatprep.subr.mxu0 0.0
        %361 = vmatpush1.msra.mxu0 0.0
        %362 = vmatprep.subr.mxu0 0.0
        %363 = vmatpush1.msra.mxu0 0.0
        %364 = vmatprep.subr.mxu0 0.0
        %365 = vmatpush1.msra.mxu0 0.0
        %366 = vmatprep.subr.mxu0 0.0
        %367 = vmatpush1.msra.mxu0 0.0
        %368 = vmatprep.subr.mxu0 0.0
        %369 = vmatpush1.msra.mxu0 0.0
        %370 = vmatprep.subr.mxu0 0.0
        %371 = vmatpush1.msra.mxu0 0.0
        %372 = vmatprep.subr.mxu0 0.0
        %373 = vmatpush1.msra.mxu0 0.0
        %374 = vmatprep.mubr.f32.mxu0 0.0
        %375 = vmatmul.mubr.f32.gmra.mrb[0].mxu0 %v305
        %v376 = vpop.f32.mrb[0].mxu0
        %v377 = vadd.f32 0.0, %v376
        %v378 = vpop.f32.mrb[0].mxu0
        %379 = vmatprep.mubr.f32.mxu0 0.0
        %380 = vmatmul.mubr.f32.gmra.mrb[0].mxu0 %v308
        %v381 = vpop.f32.mrb[0].mxu0
        %v382 = vadd.f32 0.0, %v381
        %v383 = vpop.f32.mrb[0].mxu0
        %384 = vdwg.mxu0
        %v385 = vld [vmem:[%s3] sm:$0xff]
        %v386 = vld [vmem:[%s3 + $0x8] sm:$0xff]
        %389 = vrot.lane.b32.xlu0 %v377, 96
        %v390 = vpop.permute.xlu0 %389
        %391 = vrot.lane.b32.xlu0 %v382, 96
        %v392 = vpop.permute.xlu0 %391
        %v395 = vmul.f32 %v385, %v390
        %v396 = vmul.f32 %v386, %v392
        %v397 = vld [vmem:[%s299] sm:$0xff]
        %v398 = vld [vmem:[%s299 + $0x8] sm:$0xff]
        %v399 = vld [vmem:[#allocation5] sm:$0xff]
        %v400 = vld [vmem:[#allocation5 + $0x8] sm:$0xff]
        %v401 = vadd.f32 %v397, %v399
        %v402 = vadd.f32 %v398, %v400
        %v403 = vlaneseq
        %v404 = vshrl.u32 %v403, 7
        %v405 = vadd.s32 %v404, 8
        %v406 = vlaneseq
        %v407 = vand.u32 %v406, 127
        %vm408 = vcmp.eq.s32.totalorder %v404, %v407
        %vm409 = vcmp.eq.s32.totalorder %v405, %v407
        %v410 = vsel %vm408, %v401, 0.0
        %v411 = vsel %vm409, %v402, 0.0
        %vm412 = vcmask 130048
        %v413 = vsel %vm412, %v410, 0.0
        %414 = vadd.xlane.f32.xlu0 %v413
        %v415 = vpop.xlane.xlu0 %414
        %v416 = vsel %vm412, %v411, 0.0
        %417 = vadd.xlane.f32.xlu0 %v416
        %v418 = vpop.xlane.xlu0 %417
        %419 = vxpose.xlu0.b32.start [1/16] %v401, 128
        %420 = vxpose.xlu0.b32.cont [2/16] %v402, 128
        %421 = vxpose.xlu0.b32.cont [3/16] 0.0, 128
        %422 = vxpose.xlu0.b32.cont [4/16] 0.0, 128
        %423 = vxpose.xlu0.b32.cont [5/16] 0.0, 128
        %424 = vxpose.xlu0.b32.cont [6/16] 0.0, 128
        %425 = vxpose.xlu0.b32.cont [7/16] 0.0, 128
        %426 = vxpose.xlu0.b32.cont [8/16] 0.0, 128
        %427 = vxpose.xlu0.b32.cont [9/16] 0.0, 128
        %428 = vxpose.xlu0.b32.cont [10/16] 0.0, 128
        %429 = vxpose.xlu0.b32.cont [11/16] 0.0, 128
        %430 = vxpose.xlu0.b32.cont [12/16] 0.0, 128
        %431 = vxpose.xlu0.b32.cont [13/16] 0.0, 128
        %432 = vxpose.xlu0.b32.cont [14/16] 0.0, 128
        %433 = vxpose.xlu0.b32.cont [15/16] 0.0, 128
        %434 = vxpose.xlu0.b32.end [16/16] 0.0, 128
        %v435 = vpop.trf.xlu0
        %v436 = vpop.trf.xlu0
        %v437 = vpop.trf.xlu0
        %v438 = vpop.trf.xlu0
        %v439 = vpop.trf.xlu0
        %v440 = vpop.trf.xlu0
        %v441 = vpop.trf.xlu0
        %v442 = vpop.trf.xlu0
        %v443 = vpop.trf.xlu0
        %v444 = vpop.trf.xlu0
        %v445 = vpop.trf.xlu0
        %v446 = vpop.trf.xlu0
        %v447 = vpop.trf.xlu0
        %v448 = vpop.trf.xlu0
        %v449 = vpop.trf.xlu0
        %v450 = vpop.trf.xlu0
        %v451 = vadd.f32 %v435, %v401
        %v452 = vadd.f32 %v436, %v402
        %v453 = vmul.f32 %v451, 0.5
        %v454 = vmul.f32 %v452, 0.5
        %v455 = vmul.f32 %v385, %v377
        %v456 = vmul.f32 %v386, %v382
        %v457 = vmul.f32 %v415, %v455
        %v458 = vmul.f32 %v418, %v456
        %v460 = vsel %vm412, %v453, 0
        %v463 = vsel %vm412, %v454, 0
        %465 = vmatprep.subr.mxu0 0.0
        %466 = vmatpush1.msra.mxu0 %v395
        %467 = vmatprep.subr.mxu0 0.0
        %468 = vmatpush1.msra.mxu0 %v396
        %469 = vmatprep.subr.mxu0 0.0
        %470 = vmatpush1.msra.mxu0 0.0
        %471 = vmatprep.subr.mxu0 0.0
        %472 = vmatpush1.msra.mxu0 0.0
        %473 = vmatprep.subr.mxu0 0.0
        %474 = vmatpush1.msra.mxu0 0.0
        %475 = vmatprep.subr.mxu0 0.0
        %476 = vmatpush1.msra.mxu0 0.0
        %477 = vmatprep.subr.mxu0 0.0
        %478 = vmatpush1.msra.mxu0 0.0
        %479 = vmatprep.subr.mxu0 0.0
        %480 = vmatpush1.msra.mxu0 0.0
        %481 = vmatprep.subr.mxu0 0.0
        %482 = vmatpush1.msra.mxu0 0.0
        %483 = vmatprep.subr.mxu0 0.0
        %484 = vmatpush1.msra.mxu0 0.0
        %485 = vmatprep.subr.mxu0 0.0
        %486 = vmatpush1.msra.mxu0 0.0
        %487 = vmatprep.subr.mxu0 0.0
        %488 = vmatpush1.msra.mxu0 0.0
        %489 = vmatprep.subr.mxu0 0.0
        %490 = vmatpush1.msra.mxu0 0.0
        %491 = vmatprep.subr.mxu0 0.0
        %492 = vmatpush1.msra.mxu0 0.0
        %493 = vmatprep.subr.mxu0 0.0
        %494 = vmatpush1.msra.mxu0 0.0
        %495 = vmatprep.subr.mxu0 0.0
        %496 = vmatpush1.msra.mxu0 0.0
        %497 = vmatprep.subr.mxu0 0.0
        %498 = vmatpush1.msra.mxu0 0.0
        %499 = vmatprep.subr.mxu0 0.0
        %500 = vmatpush1.msra.mxu0 0.0
        %501 = vmatprep.subr.mxu0 0.0
        %502 = vmatpush1.msra.mxu0 0.0
        %503 = vmatprep.subr.mxu0 0.0
        %504 = vmatpush1.msra.mxu0 0.0
        %505 = vmatprep.subr.mxu0 0.0
        %506 = vmatpush1.msra.mxu0 0.0
        %507 = vmatprep.subr.mxu0 0.0
        %508 = vmatpush1.msra.mxu0 0.0
        %509 = vmatprep.subr.mxu0 0.0
        %510 = vmatpush1.msra.mxu0 0.0
        %511 = vmatprep.subr.mxu0 0.0
        %512 = vmatpush1.msra.mxu0 0.0
        %513 = vmatprep.subr.mxu0 0.0
        %514 = vmatpush1.msra.mxu0 0.0
        %515 = vmatprep.subr.mxu0 0.0
        %516 = vmatpush1.msra.mxu0 0.0
        %517 = vmatprep.subr.mxu0 0.0
        %518 = vmatpush1.msra.mxu0 0.0
        %519 = vmatprep.subr.mxu0 0.0
        %520 = vmatpush1.msra.mxu0 0.0
        %521 = vmatprep.subr.mxu0 0.0
        %522 = vmatpush1.msra.mxu0 0.0
        %523 = vmatprep.subr.mxu0 0.0
        %524 = vmatpush1.msra.mxu0 0.0
        %525 = vmatprep.subr.mxu0 0.0
        %526 = vmatpush1.msra.mxu0 0.0
        %527 = vmatprep.subr.mxu0 0.0
        %528 = vmatpush1.msra.mxu0 0.0
        %529 = vmatprep.mubr.f32.mxu0 0.0
        %530 = vmatmul.mubr.f32.gmra.mrb[0].mxu0 %v460
        %v531 = vpop.f32.mrb[0].mxu0
        %v532 = vadd.f32 %v457, %v531
        %v533 = vpop.f32.mrb[0].mxu0
        %534 = vmatprep.mubr.f32.mxu0 0.0
        %535 = vmatmul.mubr.f32.gmra.mrb[0].mxu0 %v463
        %v536 = vpop.f32.mrb[0].mxu0
        %v537 = vadd.f32 %v458, %v536
        %v538 = vpop.f32.mrb[0].mxu0
        %539 = vdwg.mxu0
        %v540 = vld [vmem:[%s5] sm:$0x1]
        %v542 = vlaneseq
        %v543 = vshrl.u32 %v542, 7
        %v544 = vsub.s32 0, %v543
        %v545 = vrot.slane %v540, %v544
        %v547 = vadd.f32 %v532, %v545
        %v548 = vadd.f32 %v537, %v545
        %vm549 = vcmask 261120
        %550 = vst.msk [vmem:[%s288] sm:$0xff] %vm549, %v547
        %551 = vst.msk [vmem:[%s288 + $0x8] sm:$0xff] %vm549, %v548
        %s552 = sand.u32 %s166, 1
        %s553 = scalar_lea.sflag [#allocation4], %s552
        %s554 = sand.u32 %s166, 1
        %s555 = smul.addr %s554, 16
        %s556 = scalar_lea.vmem [#allocation7], %s555
        // Predicated region
        $region53: #{tpu_custom_call.1} parent=43 // pred_check
          %p557 = pneg %p176
        $region54: #{tpu_custom_call.1} parent=43 // pred_check_branch
          %559 = sbr.rel (%p557) target = $region56
        $region55: #{tpu_custom_call.1} parent=43 // pred_region
          %s561 = ssub.s32 256, 256
          %562 = vsyncadd %s553, %s561
          %s563 = smul.addr %s22, 2
          %s564 = smul.addr %s563, 128
          %s565 = scalar_lea.hbm %s6, %s564
          %s566 = sshll.u32 %s556, 4
          %s567 = int_to_ptr.vmem [resolvable:$true] %s566
          %572 = dma.vmem_to_hbm [thread:$0]  %s567, 256, %s565, %s553, 128, 128, 8
        $region56: #{tpu_custom_call.1} parent=43 // pred_fallthru
          _
      $region44: #{tpu_custom_call.1} parent=5 // pred_fallthru
        _
      %p573 = scmp.le.s32.totalorder 2, %s17
      // Predicated region
      $region57: #{tpu_custom_call.1} parent=5 // pred_check
        %p574 = pneg %p573
      $region58: #{tpu_custom_call.1} parent=5 // pred_check_branch
        %576 = sbr.rel (%p574) target = $region60
      $region59: #{tpu_custom_call.1} parent=5 // pred_region
        %s577 = ssub.s32 %s17, 2
        // Predicated region
        $region61: #{tpu_custom_call.1} parent=59 // pred_check
          %p578 = pneg %p182
        $region62: #{tpu_custom_call.1} parent=59 // pred_check_branch
          %580 = sbr.rel (%p578) target = $region64
        $region63: #{tpu_custom_call.1} parent=59 // pred_region
          %s581 = sand.u32 %s167, 1
          %s582 = scalar_lea.sflag [#allocation4], %s581
          %s583 = sand.u32 %s167, 1
          %s584 = smul.addr %s583, 16
          %s585 = scalar_lea.vmem [#allocation7], %s584
          %586 = dma.done %s582, 256
        $region64: #{tpu_custom_call.1} parent=59 // pred_fallthru
          _
      $region60: #{tpu_custom_call.1} parent=5 // pred_fallthru
        _
    $region6: #{tpu_custom_call.1} parent=1 // loop_footer
      %s21 = sadd.s32 1, %s17
    $region7: #{tpu_custom_call.1} parent=1 // loop_footer_branch
      %16 = sbr.rel target = $region3
    $region8: #{tpu_custom_call.1} parent=1 // loop_exit
      _
    %587 = vsyncpa [#allocation3], 1
    %s588 = scalar_lea.sflag [#allocation3], 1
    %589 = vsyncpa %s588, 1
    %590 = vsyncpa [#allocation6], 1
    %591 = vsyncpa [#allocation4], 1
    %s592 = scalar_lea.sflag [#allocation4], 1
    %593 = vsyncpa %s592, 1

</llo_original>
